<compile_context>
chip_gen: v6e
topology: v6e:2x2x1
jax: 0.10.0
libtpu: 0.0.40
codegen_flags: <defaults>
</compile_context>

<pallas_src>
import functools

import jax
import jax.numpy as jnp
from jax.experimental import pallas as pl
from jax.experimental.pallas import tpu as pltpu


def _round_up(n, m):
    return ((n + m - 1) // m) * m


def _coupling_kernel(x_ref, mask_ref, inv_mask_ref,
                     w1_ref, b1_ref, w2_ref, b2_ref, w3_ref, b3_ref,
                     y_ref, s_ref, *, inv_t, d, mxu_dtype):
    x = x_ref[...]                        # (TILE_B, D) f32
    mask = mask_ref[...]                  # (1, D) f32, broadcasts over batch
    inv_mask = inv_mask_ref[...]          # (1, D) f32 == 1 - mask
    x_m = x * mask

    def dot(h, w_ref):
        # Downcast only the MXU operand; accumulate in f32.
        return jnp.dot(h.astype(mxu_dtype), w_ref[...],
                       preferred_element_type=jnp.float32)

    # Fused s/t MLP: layer 1 concatenated, layers 2/3 block-diagonal.
    h1 = jnp.maximum(dot(x_m, w1_ref) + b1_ref[...], 0.0)   # (TILE_B, 2H)
    h2 = jnp.maximum(dot(h1, w2_ref) + b2_ref[...], 0.0)    # (TILE_B, 2H)
    out = dot(h2, w3_ref) + b3_ref[...]                      # (TILE_B, 2D)

    s_out = jnp.tanh(out[:, :d]) * inv_t                     # (TILE_B, D)
    t_out = out[:, d:]                                       # (TILE_B, D)

    y_ref[...] = x_m + inv_mask * (x * jnp.exp(s_out) + t_out)
    s_ref[...] = s_out                                       # lane-dense; reduced outside


def coupling_layer_forward(x, mask, params, t=1.0, tile_b=256,
                           mxu_dtype=jnp.float32):
    """Forward pass of CouplingLayer. Returns (y, log_det_jacobian)."""
    B, D = x.shape
    H = params["s_w1"].shape[1]
    D_out = params["s_w3"].shape[1]

    # Batch tiling (second-to-last dim must be a multiple of 8).
    tile_eff = _round_up(min(tile_b, _round_up(B, 8)), 8)
    b_pad = _round_up(B, tile_eff)
    x_p = jnp.pad(x, ((0, b_pad - B), (0, 0))) if b_pad != B else x
    n_tiles = b_pad // tile_eff

    mask2 = mask.reshape(1, D).astype(jnp.float32)
    inv_mask2 = 1.0 - mask2

    f32 = jnp.float32
    zHH = jnp.zeros((H, H), f32)
    zHD = jnp.zeros((H, D_out), f32)

    # Fused weights (cast MXU operands to mxu_dtype once, in the wrapper).
    w1 = jnp.concatenate([params["s_w1"], params["t_w1"]], axis=1).astype(mxu_dtype)
    b1 = jnp.concatenate([params["s_b1"], params["t_b1"]], axis=1).astype(f32)
    w2 = jnp.concatenate(
        [jnp.concatenate([params["s_w2"], zHH], axis=1),
         jnp.concatenate([zHH, params["t_w2"]], axis=1)], axis=0).astype(mxu_dtype)
    b2 = jnp.concatenate([params["s_b2"], params["t_b2"]], axis=1).astype(f32)
    w3 = jnp.concatenate(
        [jnp.concatenate([params["s_w3"], zHD], axis=1),
         jnp.concatenate([zHD, params["t_w3"]], axis=1)], axis=0).astype(mxu_dtype)
    b3 = jnp.concatenate([params["s_b3"], params["t_b3"]], axis=1).astype(f32)

    def tiled(a):   # batch-tiled operand
        return pl.BlockSpec((tile_eff, a.shape[1]), lambda i: (i, 0))

    def resident(a):  # weights / masks stay pinned in VMEM across grid steps
        return pl.BlockSpec(a.shape, lambda i: (0, 0))

    args = (x_p, mask2, inv_mask2, w1, b1, w2, b2, w3, b3)
    in_specs = [tiled(x_p)] + [resident(a) for a in args[1:]]

    y_p, s_p = pl.pallas_call(
        functools.partial(_coupling_kernel, inv_t=1.0 / float(t), d=D_out,
                          mxu_dtype=mxu_dtype),
        grid=(n_tiles,),
        out_shape=(
            jax.ShapeDtypeStruct((b_pad, D), jnp.float32),
            jax.ShapeDtypeStruct((b_pad, D_out), jnp.float32),
        ),
        in_specs=in_specs,
        out_specs=(
            pl.BlockSpec((tile_eff, D), lambda i: (i, 0)),
            pl.BlockSpec((tile_eff, D_out), lambda i: (i, 0)),
        ),
        compiler_params=pltpu.CompilerParams(
            dimension_semantics=("parallel",),
            vmem_limit_bytes=32 * 1024 * 1024,
        ),
    )(*args)

    y = y_p[:B]
    log_det = jnp.sum(s_p[:B], axis=1)   # cheap XLA reduction outside the kernel
    return y, log_det


def _init_params(key, input_dim, output_dim, hid_dim):
    """Deterministic synthetic parameters. Weights stored as (in, out)."""
    ks = jax.random.split(key, 12)
    scale = 0.1

    def w(k, shape):
        return (scale * jax.random.normal(k, shape)).astype(jnp.float32)

    return {
        "s_w1": w(ks[0], (input_dim, hid_dim)),   "s_b1": w(ks[1], (1, hid_dim)),
        "s_w2": w(ks[2], (hid_dim, hid_dim)),     "s_b2": w(ks[3], (1, hid_dim)),
        "s_w3": w(ks[4], (hid_dim, output_dim)),  "s_b3": w(ks[5], (1, output_dim)),
        "t_w1": w(ks[6], (input_dim, hid_dim)),   "t_b1": w(ks[7], (1, hid_dim)),
        "t_w2": w(ks[8], (hid_dim, hid_dim)),     "t_b2": w(ks[9], (1, hid_dim)),
        "t_w3": w(ks[10], (hid_dim, output_dim)), "t_b3": w(ks[11], (1, output_dim)),
    }


def _reference_forward(x, mask, params, t=1.0):
    """Pure-JAX reference mirroring the PyTorch forward (layer_reg=None)."""
    mask2 = mask.reshape(1, -1)
    x_m = x * mask2

    def mlp(h, w1, b1, w2, b2, w3, b3):
        h1 = jax.nn.relu(h @ w1 + b1)
        h2 = jax.nn.relu(h1 @ w2 + b2)
        return h2 @ w3 + b3

    s_out = jnp.tanh(mlp(x_m, params["s_w1"], params["s_b1"],
                         params["s_w2"], params["s_b2"],
                         params["s_w3"], params["s_b3"])) / t
    t_out = mlp(x_m, params["t_w1"], params["t_b1"],
                params["t_w2"], params["t_b2"],
                params["t_w3"], params["t_b3"])
    y = x_m + (1.0 - mask2) * (x * jnp.exp(s_out) + t_out)
    return y, s_out.sum(axis=1)


if __name__ == "__main__":
    key = jax.random.PRNGKey(0)
    k_x, k_p = jax.random.split(key)

    B, D, H = 64, 8, 32          # batch, input/output dim, hidden dim
    t_val = 1.0

    x = jax.random.normal(k_x, (B, D), dtype=jnp.float32)
    # Alternating binary mask (checkerboard over features), like RealNVP.
    mask = (jnp.arange(D) % 2).astype(jnp.float32)
    params = _init_params(k_p, D, D, H)

    y_ref, ld_ref = _reference_forward(x, mask, params, t=t_val)

    # f32 MXU feed: exact match with the pure-JAX reference.
    y, log_det = coupling_layer_forward(x, mask, params, t=t_val, tile_b=32)
    jax.block_until_ready((y, log_det))
    assert jnp.allclose(y, y_ref, atol=1e-5, rtol=1e-5)
    assert jnp.allclose(log_det, ld_ref, atol=1e-5, rtol=1e-5)

    # bf16 MXU feed (v6e/v7x fast path): f32 accumulate + f32 elementwise,
    # compared against the f32 reference at a looser tolerance.
    y16, ld16 = coupling_layer_forward(x, mask, params, t=t_val, tile_b=32,
                                       mxu_dtype=jnp.bfloat16)
    jax.block_until_ready((y16, ld16))
    assert jnp.allclose(y16, y_ref, atol=5e-2, rtol=5e-2)
    assert jnp.allclose(ld16, ld_ref, atol=5e-2, rtol=5e-2)

    print("KERNEL_OK")
</pallas_src>

<mosaic_0001>
module attributes {stable_mosaic.version = 11 : i64} {
  func.func @_coupling_kernel(%arg0: i32, %arg1: memref<32x8xf32, #tpu.memory_space<vmem>>, %arg2: memref<1x8xf32, #tpu.memory_space<vmem>>, %arg3: memref<1x8xf32, #tpu.memory_space<vmem>>, %arg4: memref<8x64xf32, #tpu.memory_space<vmem>>, %arg5: memref<1x64xf32, #tpu.memory_space<vmem>>, %arg6: memref<64x64xf32, #tpu.memory_space<vmem>>, %arg7: memref<1x64xf32, #tpu.memory_space<vmem>>, %arg8: memref<64x16xf32, #tpu.memory_space<vmem>>, %arg9: memref<1x16xf32, #tpu.memory_space<vmem>>, %arg10: memref<32x8xf32, #tpu.memory_space<vmem>>, %arg11: memref<32x8xf32, #tpu.memory_space<vmem>>) attributes {dimension_semantics = [#tpu.dimension_semantics<parallel>], iteration_bounds = array<i64: 2>, scalar_prefetch = 0 : i64, scratch_operands = 0 : i64, tpu.core_type = #tpu.core_type<tc>, window_params = [{transform_indices = @transform_0, window_bounds = array<i64: 32, 8>}, {pipeline_mode = #tpu.pipeline_mode<synchronous>, transform_indices = @transform_1, window_bounds = array<i64: 1, 8>}, {pipeline_mode = #tpu.pipeline_mode<synchronous>, transform_indices = @transform_2, window_bounds = array<i64: 1, 8>}, {pipeline_mode = #tpu.pipeline_mode<synchronous>, transform_indices = @transform_3, window_bounds = array<i64: 8, 64>}, {pipeline_mode = #tpu.pipeline_mode<synchronous>, transform_indices = @transform_4, window_bounds = array<i64: 1, 64>}, {pipeline_mode = #tpu.pipeline_mode<synchronous>, transform_indices = @transform_5, window_bounds = array<i64: 64, 64>}, {pipeline_mode = #tpu.pipeline_mode<synchronous>, transform_indices = @transform_6, window_bounds = array<i64: 1, 64>}, {pipeline_mode = #tpu.pipeline_mode<synchronous>, transform_indices = @transform_7, window_bounds = array<i64: 64, 16>}, {pipeline_mode = #tpu.pipeline_mode<synchronous>, transform_indices = @transform_8, window_bounds = array<i64: 1, 16>}, {transform_indices = @transform_9, window_bounds = array<i64: 32, 8>}, {transform_indices = @transform_10, window_bounds = array<i64: 32, 8>}]} {
    %c0 = arith.constant 0 : index
    %c0_0 = arith.constant 0 : index
    %0 = vector.load %arg1[%c0, %c0_0] : memref<32x8xf32, #tpu.memory_space<vmem>>, vector<32x8xf32>
    %c0_1 = arith.constant 0 : index
    %c0_2 = arith.constant 0 : index
    %1 = vector.load %arg2[%c0_1, %c0_2] : memref<1x8xf32, #tpu.memory_space<vmem>>, vector<1x8xf32>
    %c0_3 = arith.constant 0 : index
    %c0_4 = arith.constant 0 : index
    %2 = vector.load %arg3[%c0_3, %c0_4] : memref<1x8xf32, #tpu.memory_space<vmem>>, vector<1x8xf32>
    %3 = vector.broadcast %1 : vector<1x8xf32> to vector<32x8xf32>
    %4 = arith.mulf %0, %3 : vector<32x8xf32>
    %c0_5 = arith.constant 0 : index
    %c0_6 = arith.constant 0 : index
    %5 = vector.load %arg4[%c0_5, %c0_6] : memref<8x64xf32, #tpu.memory_space<vmem>>, vector<8x64xf32>
    %cst = arith.constant dense<0.000000e+00> : vector<32x64xf32>
    %6 = tpu.matmul %4, %5, %cst {dimension_numbers = #tpu.dot_dimension_numbers<[1], [0], [0], [1], [0, 0, 1, 1], [], []>} : vector<32x8xf32>, vector<8x64xf32>, vector<32x64xf32> -> vector<32x64xf32>
    %c0_7 = arith.constant 0 : index
    %c0_8 = arith.constant 0 : index
    %7 = vector.load %arg5[%c0_7, %c0_8] : memref<1x64xf32, #tpu.memory_space<vmem>>, vector<1x64xf32>
    %8 = vector.broadcast %7 : vector<1x64xf32> to vector<32x64xf32>
    %9 = arith.addf %6, %8 : vector<32x64xf32>
    %cst_9 = arith.constant 0.000000e+00 : f32
    %10 = vector.broadcast %cst_9 : f32 to vector<32x64xf32>
    %11 = arith.maximumf %9, %10 : vector<32x64xf32>
    %c0_10 = arith.constant 0 : index
    %c0_11 = arith.constant 0 : index
    %12 = vector.load %arg6[%c0_10, %c0_11] : memref<64x64xf32, #tpu.memory_space<vmem>>, vector<64x64xf32>
    %cst_12 = arith.constant dense<0.000000e+00> : vector<32x64xf32>
    %13 = tpu.matmul %11, %12, %cst_12 {dimension_numbers = #tpu.dot_dimension_numbers<[1], [0], [0], [1], [0, 0, 1, 1], [], []>} : vector<32x64xf32>, vector<64x64xf32>, vector<32x64xf32> -> vector<32x64xf32>
    %c0_13 = arith.constant 0 : index
    %c0_14 = arith.constant 0 : index
    %14 = vector.load %arg7[%c0_13, %c0_14] : memref<1x64xf32, #tpu.memory_space<vmem>>, vector<1x64xf32>
    %15 = vector.broadcast %14 : vector<1x64xf32> to vector<32x64xf32>
    %16 = arith.addf %13, %15 : vector<32x64xf32>
    %cst_15 = arith.constant 0.000000e+00 : f32
    %17 = vector.broadcast %cst_15 : f32 to vector<32x64xf32>
    %18 = arith.maximumf %16, %17 : vector<32x64xf32>
    %c0_16 = arith.constant 0 : index
    %c0_17 = arith.constant 0 : index
    %19 = vector.load %arg8[%c0_16, %c0_17] : memref<64x16xf32, #tpu.memory_space<vmem>>, vector<64x16xf32>
    %cst_18 = arith.constant dense<0.000000e+00> : vector<32x16xf32>
    %20 = tpu.matmul %18, %19, %cst_18 {dimension_numbers = #tpu.dot_dimension_numbers<[1], [0], [0], [1], [0, 0, 1, 1], [], []>} : vector<32x64xf32>, vector<64x16xf32>, vector<32x16xf32> -> vector<32x16xf32>
    %c0_19 = arith.constant 0 : index
    %c0_20 = arith.constant 0 : index
    %21 = vector.load %arg9[%c0_19, %c0_20] : memref<1x16xf32, #tpu.memory_space<vmem>>, vector<1x16xf32>
    %22 = vector.broadcast %21 : vector<1x16xf32> to vector<32x16xf32>
    %23 = arith.addf %20, %22 : vector<32x16xf32>
    %24 = vector.extract_strided_slice %23 {offsets = [0, 0], sizes = [32, 8], strides = [1, 1]} : vector<32x16xf32> to vector<32x8xf32>
    %25 = math.tanh %24 : vector<32x8xf32>
    %cst_21 = arith.constant 1.000000e+00 : f32
    %26 = vector.broadcast %cst_21 : f32 to vector<32x8xf32>
    %27 = arith.mulf %25, %26 : vector<32x8xf32>
    %28 = vector.extract_strided_slice %23 {offsets = [0, 8], sizes = [32, 8], strides = [1, 1]} : vector<32x16xf32> to vector<32x8xf32>
    %29 = math.exp %27 : vector<32x8xf32>
    %30 = arith.mulf %0, %29 : vector<32x8xf32>
    %31 = arith.addf %30, %28 : vector<32x8xf32>
    %32 = vector.broadcast %2 : vector<1x8xf32> to vector<32x8xf32>
    %33 = arith.mulf %32, %31 : vector<32x8xf32>
    %34 = arith.addf %4, %33 : vector<32x8xf32>
    %c0_22 = arith.constant 0 : index
    %c0_23 = arith.constant 0 : index
    %35 = vector.load %arg10[%c0_22, %c0_23] : memref<32x8xf32, #tpu.memory_space<vmem>>, vector<32x8xf32>
    tpu.vector_store %arg10[%c0_22, %c0_23], %34 {strides = array<i32>} : memref<32x8xf32, #tpu.memory_space<vmem>>, vector<32x8xf32>,
    %c0_24 = arith.constant 0 : index
    %c0_25 = arith.constant 0 : index
    %36 = vector.load %arg11[%c0_24, %c0_25] : memref<32x8xf32, #tpu.memory_space<vmem>>, vector<32x8xf32>
    tpu.vector_store %arg11[%c0_24, %c0_25], %27 {strides = array<i32>} : memref<32x8xf32, #tpu.memory_space<vmem>>, vector<32x8xf32>,
    return
  }
  func.func @transform_0(%arg0: i32) -> (i32, i32) {
    %c0_i32 = arith.constant 0 : i32
    %c0_i32_0 = arith.constant 0 : i32
    return %arg0, %c0_i32 : i32, i32
  }
  func.func @transform_1(%arg0: i32) -> (i32, i32) {
    %c0_i32 = arith.constant 0 : i32
    %c0_i32_0 = arith.constant 0 : i32
    %c0_i32_1 = arith.constant 0 : i32
    return %c0_i32, %c0_i32_0 : i32, i32
  }
  func.func @transform_2(%arg0: i32) -> (i32, i32) {
    %c0_i32 = arith.constant 0 : i32
    %c0_i32_0 = arith.constant 0 : i32
    %c0_i32_1 = arith.constant 0 : i32
    return %c0_i32, %c0_i32_0 : i32, i32
  }
  func.func @transform_3(%arg0: i32) -> (i32, i32) {
    %c0_i32 = arith.constant 0 : i32
    %c0_i32_0 = arith.constant 0 : i32
    %c0_i32_1 = arith.constant 0 : i32
    return %c0_i32, %c0_i32_0 : i32, i32
  }
  func.func @transform_4(%arg0: i32) -> (i32, i32) {
    %c0_i32 = arith.constant 0 : i32
    %c0_i32_0 = arith.constant 0 : i32
    %c0_i32_1 = arith.constant 0 : i32
    return %c0_i32, %c0_i32_0 : i32, i32
  }
  func.func @transform_5(%arg0: i32) -> (i32, i32) {
    %c0_i32 = arith.constant 0 : i32
    %c0_i32_0 = arith.constant 0 : i32
    %c0_i32_1 = arith.constant 0 : i32
    return %c0_i32, %c0_i32_0 : i32, i32
  }
  func.func @transform_6(%arg0: i32) -> (i32, i32) {
    %c0_i32 = arith.constant 0 : i32
    %c0_i32_0 = arith.constant 0 : i32
    %c0_i32_1 = arith.constant 0 : i32
    return %c0_i32, %c0_i32_0 : i32, i32
  }
  func.func @transform_7(%arg0: i32) -> (i32, i32) {
    %c0_i32 = arith.constant 0 : i32
    %c0_i32_0 = arith.constant 0 : i32
    %c0_i32_1 = arith.constant 0 : i32
    return %c0_i32, %c0_i32_0 : i32, i32
  }
  func.func @transform_8(%arg0: i32) -> (i32, i32) {
    %c0_i32 = arith.constant 0 : i32
    %c0_i32_0 = arith.constant 0 : i32
    %c0_i32_1 = arith.constant 0 : i32
    return %c0_i32, %c0_i32_0 : i32, i32
  }
  func.func @transform_9(%arg0: i32) -> (i32, i32) {
    %c0_i32 = arith.constant 0 : i32
    %c0_i32_0 = arith.constant 0 : i32
    return %arg0, %c0_i32 : i32, i32
  }
  func.func @transform_10(%arg0: i32) -> (i32, i32) {
    %c0_i32 = arith.constant 0 : i32
    %c0_i32_0 = arith.constant 0 : i32
    return %arg0, %c0_i32 : i32, i32
  }
}

</mosaic_0001>

<llo_original>
// kernel: tpu_custom_call.1
$region0: #{tpu_custom_call.1}
  #allocation0 [shape = 'u32[]', space=smem, size = 0x4, offset = 0x4, fixed_abs, tag = 'smem constant byte address 0x4 - core index']
  #allocation1 [shape = 'u32[144,128]{1,0:T(1,128)}', space=vmem, size = 0x12000, scoped, tag = 'internal scratch']
  %s0 = inlined_call_operand.vmem [shape: f32[64,8], index: 0, kind: input, shape index: {}]
  %s1 = inlined_call_operand.vmem [shape: f32[1,8], index: 1, kind: input, shape index: {}]
  %s2 = inlined_call_operand.vmem [shape: f32[1,8], index: 2, kind: input, shape index: {}]
  %s3 = inlined_call_operand.vmem [shape: f32[8,64], index: 3, kind: input, shape index: {}]
  %s4 = inlined_call_operand.vmem [shape: f32[1,64], index: 4, kind: input, shape index: {}]
  %s5 = inlined_call_operand.vmem [shape: f32[64,64], index: 5, kind: input, shape index: {}]
  %s6 = inlined_call_operand.vmem [shape: f32[1,64], index: 6, kind: input, shape index: {}]
  %s7 = inlined_call_operand.vmem [shape: f32[64,16], index: 7, kind: input, shape index: {}]
  %s8 = inlined_call_operand.vmem [shape: f32[1,16], index: 8, kind: input, shape index: {}]
  %s9 = inlined_call_operand.vmem [shape: f32[64,8], index: 9, kind: output, shape index: {0}]
  %s10 = inlined_call_operand.vmem [shape: f32[64,8], index: 10, kind: output, shape index: {1}]
  %11 = xla_tuple %s9, %s10
  %s12 = sld [smem:[#allocation0]]
  $region77: #{tpu_custom_call.1} parent=0
    _
  %s14 = ssub.s32 1, %s12
  %s15 = scalar_select 0, %s14, %s12
  loop: start=0, step=1, limit=4
  $region2: #{tpu_custom_call.1} parent=0 // loop_pre_header
    _
  $region3: #{tpu_custom_call.1} parent=0 // loop_header
    %s17 = sphi 0, %s21
    %p18 = scmp.ge.s32.totalorder %s17, 4
    %s27 = sphi 0, %s29
    %s30 = sphi 0, %s27
    %s31 = sphi 0, %s30
    %s47 = sphi 0, %s31
    %s51 = sphi 0, %s51
    %s53 = sphi 0, %s51
    %s54 = sphi 0, %s53
    %s68 = sphi 0, %s54
    %s72 = sphi 0, %s72
    %s74 = sphi 0, %s72
    %s75 = sphi 0, %s74
    %s89 = sphi 0, %s75
    %s93 = sphi 0, %s93
    %s95 = sphi 0, %s93
    %s96 = sphi 0, %s95
    %s110 = sphi 0, %s96
    %s114 = sphi 0, %s114
    %s116 = sphi 0, %s114
    %s117 = sphi 0, %s116
    %s131 = sphi 0, %s117
    %s135 = sphi 0, %s135
    %s137 = sphi 0, %s135
    %s138 = sphi 0, %s137
    %s152 = sphi 0, %s138
    %s156 = sphi 0, %s156
    %s158 = sphi 0, %s156
    %s159 = sphi 0, %s158
    %s173 = sphi 0, %s159
    %s177 = sphi 0, %s177
    %s179 = sphi 0, %s177
    %s180 = sphi 0, %s179
    %s194 = sphi 0, %s180
    %s198 = sphi 0, %s198
    %s200 = sphi 0, %s198
    %s201 = sphi 0, %s200
    %s215 = sphi 0, %s201
    %s221 = sphi 0, %s223
    %s224 = sphi 0, %s221
    %s225 = sphi 0, %s224
    %s241 = sphi 0, %s225
    %s247 = sphi 0, %s249
    %s250 = sphi 0, %s247
    %s251 = sphi 0, %s250
    %s267 = sphi 0, %s251
  $region4: #{tpu_custom_call.1} parent=0 // loop_header_branch
    %20 = sbr.rel (%p18) target = $region8
  $region5: #{tpu_custom_call.1} parent=0 // loop_body
    %s22 = ssub.s32 %s17, 1
    %s23 = ssub.s32 %s17, 2
    %s24 = sadd.s32 %s17, 1
    %s25 = ssub.s32 %s17, %s24
    %p26 = scmp.eq.s32.totalorder %s25, 0
    %s28 = sadd.s32 %s27, 1
    %s29 = scalar_select %p26, %s27, %s28
    %p32 = pneg %p26
    %p33 = scmp.eq.s32.totalorder %s17, 1
    %p34 = por %p32, %p33
    %p35 = scmp.ne.s32.totalorder %s27, %s30
    %p36 = scmp.eq.s32.totalorder %s17, 0
    %p37 = por %p35, %p36
    %p38 = scmp.ne.s32.totalorder %s27, %s30
    %p39 = scmp.eq.s32.totalorder %s22, 1
    %p40 = por %p38, %p39
    %p41 = scmp.ne.s32.totalorder %s30, %s31
    %p42 = scmp.eq.s32.totalorder %s22, 0
    %p43 = por %p41, %p42
    %p44 = scmp.ne.s32.totalorder %s30, %s31
    %p45 = scmp.eq.s32.totalorder %s23, 1
    %p46 = por %p44, %p45
    %p48 = scmp.ne.s32.totalorder %s31, %s47
    %p49 = scmp.eq.s32.totalorder %s23, 0
    %p50 = por %p48, %p49
    %s52 = sadd.s32 %s51, 1
    %p55 = scmp.eq.s32.totalorder %s17, 1
    %p56 = scmp.ne.s32.totalorder %s51, %s53
    %p57 = scmp.eq.s32.totalorder %s17, 0
    %p58 = por %p56, %p57
    %p59 = scmp.ne.s32.totalorder %s51, %s53
    %p60 = scmp.eq.s32.totalorder %s22, 1
    %p61 = por %p59, %p60
    %p62 = scmp.ne.s32.totalorder %s53, %s54
    %p63 = scmp.eq.s32.totalorder %s22, 0
    %p64 = por %p62, %p63
    %p65 = scmp.ne.s32.totalorder %s53, %s54
    %p66 = scmp.eq.s32.totalorder %s23, 1
    %p67 = por %p65, %p66
    %p69 = scmp.ne.s32.totalorder %s54, %s68
    %p70 = scmp.eq.s32.totalorder %s23, 0
    %p71 = por %p69, %p70
    %s73 = sadd.s32 %s72, 1
    %p76 = scmp.eq.s32.totalorder %s17, 1
    %p77 = scmp.ne.s32.totalorder %s72, %s74
    %p78 = scmp.eq.s32.totalorder %s17, 0
    %p79 = por %p77, %p78
    %p80 = scmp.ne.s32.totalorder %s72, %s74
    %p81 = scmp.eq.s32.totalorder %s22, 1
    %p82 = por %p80, %p81
    %p83 = scmp.ne.s32.totalorder %s74, %s75
    %p84 = scmp.eq.s32.totalorder %s22, 0
    %p85 = por %p83, %p84
    %p86 = scmp.ne.s32.totalorder %s74, %s75
    %p87 = scmp.eq.s32.totalorder %s23, 1
    %p88 = por %p86, %p87
    %p90 = scmp.ne.s32.totalorder %s75, %s89
    %p91 = scmp.eq.s32.totalorder %s23, 0
    %p92 = por %p90, %p91
    %s94 = sadd.s32 %s93, 1
    %p97 = scmp.eq.s32.totalorder %s17, 1
    %p98 = scmp.ne.s32.totalorder %s93, %s95
    %p99 = scmp.eq.s32.totalorder %s17, 0
    %p100 = por %p98, %p99
    %p101 = scmp.ne.s32.totalorder %s93, %s95
    %p102 = scmp.eq.s32.totalorder %s22, 1
    %p103 = por %p101, %p102
    %p104 = scmp.ne.s32.totalorder %s95, %s96
    %p105 = scmp.eq.s32.totalorder %s22, 0
    %p106 = por %p104, %p105
    %p107 = scmp.ne.s32.totalorder %s95, %s96
    %p108 = scmp.eq.s32.totalorder %s23, 1
    %p109 = por %p107, %p108
    %p111 = scmp.ne.s32.totalorder %s96, %s110
    %p112 = scmp.eq.s32.totalorder %s23, 0
    %p113 = por %p111, %p112
    %s115 = sadd.s32 %s114, 1
    %p118 = scmp.eq.s32.totalorder %s17, 1
    %p119 = scmp.ne.s32.totalorder %s114, %s116
    %p120 = scmp.eq.s32.totalorder %s17, 0
    %p121 = por %p119, %p120
    %p122 = scmp.ne.s32.totalorder %s114, %s116
    %p123 = scmp.eq.s32.totalorder %s22, 1
    %p124 = por %p122, %p123
    %p125 = scmp.ne.s32.totalorder %s116, %s117
    %p126 = scmp.eq.s32.totalorder %s22, 0
    %p127 = por %p125, %p126
    %p128 = scmp.ne.s32.totalorder %s116, %s117
    %p129 = scmp.eq.s32.totalorder %s23, 1
    %p130 = por %p128, %p129
    %p132 = scmp.ne.s32.totalorder %s117, %s131
    %p133 = scmp.eq.s32.totalorder %s23, 0
    %p134 = por %p132, %p133
    %s136 = sadd.s32 %s135, 1
    %p139 = scmp.eq.s32.totalorder %s17, 1
    %p140 = scmp.ne.s32.totalorder %s135, %s137
    %p141 = scmp.eq.s32.totalorder %s17, 0
    %p142 = por %p140, %p141
    %p143 = scmp.ne.s32.totalorder %s135, %s137
    %p144 = scmp.eq.s32.totalorder %s22, 1
    %p145 = por %p143, %p144
    %p146 = scmp.ne.s32.totalorder %s137, %s138
    %p147 = scmp.eq.s32.totalorder %s22, 0
    %p148 = por %p146, %p147
    %p149 = scmp.ne.s32.totalorder %s137, %s138
    %p150 = scmp.eq.s32.totalorder %s23, 1
    %p151 = por %p149, %p150
    %p153 = scmp.ne.s32.totalorder %s138, %s152
    %p154 = scmp.eq.s32.totalorder %s23, 0
    %p155 = por %p153, %p154
    %s157 = sadd.s32 %s156, 1
    %p160 = scmp.eq.s32.totalorder %s17, 1
    %p161 = scmp.ne.s32.totalorder %s156, %s158
    %p162 = scmp.eq.s32.totalorder %s17, 0
    %p163 = por %p161, %p162
    %p164 = scmp.ne.s32.totalorder %s156, %s158
    %p165 = scmp.eq.s32.totalorder %s22, 1
    %p166 = por %p164, %p165
    %p167 = scmp.ne.s32.totalorder %s158, %s159
    %p168 = scmp.eq.s32.totalorder %s22, 0
    %p169 = por %p167, %p168
    %p170 = scmp.ne.s32.totalorder %s158, %s159
    %p171 = scmp.eq.s32.totalorder %s23, 1
    %p172 = por %p170, %p171
    %p174 = scmp.ne.s32.totalorder %s159, %s173
    %p175 = scmp.eq.s32.totalorder %s23, 0
    %p176 = por %p174, %p175
    %s178 = sadd.s32 %s177, 1
    %p181 = scmp.eq.s32.totalorder %s17, 1
    %p182 = scmp.ne.s32.totalorder %s177, %s179
    %p183 = scmp.eq.s32.totalorder %s17, 0
    %p184 = por %p182, %p183
    %p185 = scmp.ne.s32.totalorder %s177, %s179
    %p186 = scmp.eq.s32.totalorder %s22, 1
    %p187 = por %p185, %p186
    %p188 = scmp.ne.s32.totalorder %s179, %s180
    %p189 = scmp.eq.s32.totalorder %s22, 0
    %p190 = por %p188, %p189
    %p191 = scmp.ne.s32.totalorder %s179, %s180
    %p192 = scmp.eq.s32.totalorder %s23, 1
    %p193 = por %p191, %p192
    %p195 = scmp.ne.s32.totalorder %s180, %s194
    %p196 = scmp.eq.s32.totalorder %s23, 0
    %p197 = por %p195, %p196
    %s199 = sadd.s32 %s198, 1
    %p202 = scmp.eq.s32.totalorder %s17, 1
    %p203 = scmp.ne.s32.totalorder %s198, %s200
    %p204 = scmp.eq.s32.totalorder %s17, 0
    %p205 = por %p203, %p204
    %p206 = scmp.ne.s32.totalorder %s198, %s200
    %p207 = scmp.eq.s32.totalorder %s22, 1
    %p208 = por %p206, %p207
    %p209 = scmp.ne.s32.totalorder %s200, %s201
    %p210 = scmp.eq.s32.totalorder %s22, 0
    %p211 = por %p209, %p210
    %p212 = scmp.ne.s32.totalorder %s200, %s201
    %p213 = scmp.eq.s32.totalorder %s23, 1
    %p214 = por %p212, %p213
    %p216 = scmp.ne.s32.totalorder %s201, %s215
    %p217 = scmp.eq.s32.totalorder %s23, 0
    %p218 = por %p216, %p217
    %s219 = ssub.s32 %s17, %s24
    %p220 = scmp.eq.s32.totalorder %s219, 0
    %s222 = sadd.s32 %s221, 1
    %s223 = scalar_select %p220, %s221, %s222
    %p226 = pneg %p220
    %p227 = scmp.eq.s32.totalorder %s17, 1
    %p228 = por %p226, %p227
    %p229 = scmp.ne.s32.totalorder %s221, %s224
    %p230 = scmp.eq.s32.totalorder %s17, 0
    %p231 = por %p229, %p230
    %p232 = scmp.ne.s32.totalorder %s221, %s224
    %p233 = scmp.eq.s32.totalorder %s22, 1
    %p234 = por %p232, %p233
    %p235 = scmp.ne.s32.totalorder %s224, %s225
    %p236 = scmp.eq.s32.totalorder %s22, 0
    %p237 = por %p235, %p236
    %p238 = scmp.ne.s32.totalorder %s224, %s225
    %p239 = scmp.eq.s32.totalorder %s23, 1
    %p240 = por %p238, %p239
    %p242 = scmp.ne.s32.totalorder %s225, %s241
    %p243 = scmp.eq.s32.totalorder %s23, 0
    %p244 = por %p242, %p243
    %s245 = ssub.s32 %s17, %s24
    %p246 = scmp.eq.s32.totalorder %s245, 0
    %s248 = sadd.s32 %s247, 1
    %s249 = scalar_select %p246, %s247, %s248
    %p252 = pneg %p246
    %p253 = scmp.eq.s32.totalorder %s17, 1
    %p254 = por %p252, %p253
    %p255 = scmp.ne.s32.totalorder %s247, %s250
    %p256 = scmp.eq.s32.totalorder %s17, 0
    %p257 = por %p255, %p256
    %p258 = scmp.ne.s32.totalorder %s247, %s250
    %p259 = scmp.eq.s32.totalorder %s22, 1
    %p260 = por %p258, %p259
    %p261 = scmp.ne.s32.totalorder %s250, %s251
    %p262 = scmp.eq.s32.totalorder %s22, 0
    %p263 = por %p261, %p262
    %p264 = scmp.ne.s32.totalorder %s250, %s251
    %p265 = scmp.eq.s32.totalorder %s23, 1
    %p266 = por %p264, %p265
    %p268 = scmp.ne.s32.totalorder %s251, %s267
    %p269 = scmp.eq.s32.totalorder %s23, 0
    %p270 = por %p268, %p269
    %p271 = scmp.le.s32.totalorder 1, %s17
    %p272 = scmp.lt.s32.totalorder %s17, 3
    %p273 = pnand %p271, %p272
    %p274 = pneg %p273
    // Predicated region
    $region9: #{tpu_custom_call.1} parent=5 // pred_check
      _
    $region10: #{tpu_custom_call.1} parent=5 // pred_check_branch
      %276 = sbr.rel (%p273) target = $region12
    $region11: #{tpu_custom_call.1} parent=5 // pred_region
      %s277 = ssub.s32 %s17, 1
      // Predicated region
      $region13: #{tpu_custom_call.1} parent=11 // pred_check
        %p278 = pneg %p64
      $region14: #{tpu_custom_call.1} parent=11 // pred_check_branch
        %280 = sbr.rel (%p278) target = $region16
      $region15: #{tpu_custom_call.1} parent=11 // pred_region
        _
      $region16: #{tpu_custom_call.1} parent=11 // pred_fallthru
        _
      // Predicated region
      $region17: #{tpu_custom_call.1} parent=11 // pred_check
        %p281 = pneg %p85
      $region18: #{tpu_custom_call.1} parent=11 // pred_check_branch
        %283 = sbr.rel (%p281) target = $region20
      $region19: #{tpu_custom_call.1} parent=11 // pred_region
        _
      $region20: #{tpu_custom_call.1} parent=11 // pred_fallthru
        _
      // Predicated region
      $region21: #{tpu_custom_call.1} parent=11 // pred_check
        %p284 = pneg %p106
      $region22: #{tpu_custom_call.1} parent=11 // pred_check_branch
        %286 = sbr.rel (%p284) target = $region24
      $region23: #{tpu_custom_call.1} parent=11 // pred_region
        _
      $region24: #{tpu_custom_call.1} parent=11 // pred_fallthru
        _
      // Predicated region
      $region25: #{tpu_custom_call.1} parent=11 // pred_check
        %p287 = pneg %p127
      $region26: #{tpu_custom_call.1} parent=11 // pred_check_branch
        %289 = sbr.rel (%p287) target = $region28
      $region27: #{tpu_custom_call.1} parent=11 // pred_region
        _
      $region28: #{tpu_custom_call.1} parent=11 // pred_fallthru
        _
      // Predicated region
      $region29: #{tpu_custom_call.1} parent=11 // pred_check
        %p290 = pneg %p148
      $region30: #{tpu_custom_call.1} parent=11 // pred_check_branch
        %292 = sbr.rel (%p290) target = $region32
      $region31: #{tpu_custom_call.1} parent=11 // pred_region
        _
      $region32: #{tpu_custom_call.1} parent=11 // pred_fallthru
        _
      // Predicated region
      $region33: #{tpu_custom_call.1} parent=11 // pred_check
        %p293 = pneg %p169
      $region34: #{tpu_custom_call.1} parent=11 // pred_check_branch
        %295 = sbr.rel (%p293) target = $region36
      $region35: #{tpu_custom_call.1} parent=11 // pred_region
        _
      $region36: #{tpu_custom_call.1} parent=11 // pred_fallthru
        _
      // Predicated region
      $region37: #{tpu_custom_call.1} parent=11 // pred_check
        %p296 = pneg %p190
      $region38: #{tpu_custom_call.1} parent=11 // pred_check_branch
        %298 = sbr.rel (%p296) target = $region40
      $region39: #{tpu_custom_call.1} parent=11 // pred_region
        _
      $region40: #{tpu_custom_call.1} parent=11 // pred_fallthru
        _
      // Predicated region
      $region41: #{tpu_custom_call.1} parent=11 // pred_check
        %p299 = pneg %p211
      $region42: #{tpu_custom_call.1} parent=11 // pred_check_branch
        %301 = sbr.rel (%p299) target = $region44
      $region43: #{tpu_custom_call.1} parent=11 // pred_region
        _
      $region44: #{tpu_custom_call.1} parent=11 // pred_fallthru
        _
    $region12: #{tpu_custom_call.1} parent=5 // pred_fallthru
      _
    %p302 = scmp.lt.s32.totalorder %s17, 2
    // Predicated region
    $region45: #{tpu_custom_call.1} parent=5 // pred_check
      %p303 = pneg %p302
    $region46: #{tpu_custom_call.1} parent=5 // pred_check_branch
      %305 = sbr.rel (%p303) target = $region48
    $region47: #{tpu_custom_call.1} parent=5 // pred_region
      // Predicated region
      $region49: #{tpu_custom_call.1} parent=47 // pred_check
        %p306 = pneg %p37
      $region50: #{tpu_custom_call.1} parent=47 // pred_check_branch
        %308 = sbr.rel (%p306) target = $region52
      $region51: #{tpu_custom_call.1} parent=47 // pred_region
        %s309 = smul.u32 4, %s17
        %p310 = scmp.lt.s32.totalorder %s309, 7
        %s311 = scalar_select %p310, %s309, 7
        %s312 = smul.addr %s311, 8
        %s313 = scalar_lea.vmem %s0, %s312
        %s314 = smul.u32 4, %s17
      $region52: #{tpu_custom_call.1} parent=47 // pred_fallthru
        _
    $region48: #{tpu_custom_call.1} parent=5 // pred_fallthru
      _
    %p315 = scmp.le.s32.totalorder 1, %s17
    %p316 = scmp.lt.s32.totalorder %s17, 3
    %p317 = pnand %p315, %p316
    %p318 = pneg %p317
    // Predicated region
    $region53: #{tpu_custom_call.1} parent=5 // pred_check
      _
    $region54: #{tpu_custom_call.1} parent=5 // pred_check_branch
      %320 = sbr.rel (%p317) target = $region56
    $region55: #{tpu_custom_call.1} parent=5 // pred_region
      %s321 = ssub.s32 %s17, 1
      %s322 = smul.u32 4, %s22
      %p323 = scmp.lt.s32.totalorder %s322, 7
      %s324 = scalar_select %p323, %s322, 7
      %s325 = smul.addr %s324, 8
      %s326 = scalar_lea.vmem %s0, %s325
      %p327 = pneg %p43
      %p328 = pneg %p40
      %p329 = pneg %p64
      %p330 = pneg %p61
      %p331 = pneg %p85
      %p332 = pneg %p82
      %p333 = pneg %p106
      %p334 = pneg %p103
      %p335 = pneg %p127
      %p336 = pneg %p124
      %p337 = pneg %p148
      %p338 = pneg %p145
      %p339 = pneg %p169
      %p340 = pneg %p166
      %p341 = pneg %p190
      %p342 = pneg %p187
      %p343 = pneg %p211
      %p344 = pneg %p208
      %p345 = pneg %p237
      %p346 = pneg %p234
      %s347 = smul.u32 4, %s22
      %p348 = scmp.lt.s32.totalorder %s347, 7
      %s349 = scalar_select %p348, %s347, 7
      %s350 = smul.addr %s349, 8
      %s351 = scalar_lea.vmem %s9, %s350
      %p352 = pneg %p263
      %p353 = pneg %p260
      %s354 = smul.u32 4, %s22
      %p355 = scmp.lt.s32.totalorder %s354, 7
      %s356 = scalar_select %p355, %s354, 7
      %s357 = smul.addr %s356, 8
      %s358 = scalar_lea.vmem %s10, %s357
      %s359 = smul.u32 4, %s22
      %p360 = scmp.lt.s32.totalorder %s359, 7
      %s361 = scalar_select %p360, %s359, 7
      %s362 = smul.addr %s361, 8
      %s363 = scalar_lea.vmem %s0, %s362
      %s364 = smul.u32 4, %s22
      %s365 = smul.u32 4, %s22
      %p366 = scmp.lt.s32.totalorder %s365, 7
      %s367 = scalar_select %p366, %s365, 7
      %s368 = smul.addr %s367, 8
      %s369 = scalar_lea.vmem %s9, %s368
      %s370 = smul.u32 4, %s22
      %s371 = smul.u32 4, %s22
      %p372 = scmp.lt.s32.totalorder %s371, 7
      %s373 = scalar_select %p372, %s371, 7
      %s374 = smul.addr %s373, 8
      %s375 = scalar_lea.vmem %s10, %s374
      %s376 = smul.u32 4, %s22
      %v377 = vld [vmem:[%s363] sm:$0xff]
      %v378 = vld [vmem:[%s363 + $0x8] sm:$0xff]
      %v379 = vld [vmem:[%s363 + $0x10] sm:$0xff]
      %v380 = vld [vmem:[%s363 + $0x18] sm:$0xff]
      %v381 = vld [vmem:[%s1] sm:$0x1]
      %v382 = vld [vmem:[%s2] sm:$0x1]
      %v384 = vlaneseq
      %v385 = vshrl.u32 %v384, 7
      %v386 = vsub.s32 0, %v385
      %v387 = vrot.slane %v381, %v386
      %v389 = vmul.f32 %v377, %v387
      %v390 = vmul.f32 %v378, %v387
      %v391 = vmul.f32 %v379, %v387
      %v392 = vmul.f32 %v380, %v387
      %v393 = vld [vmem:[%s3] sm:$0xff]
      %v394 = vld [vmem:[%s4] sm:$0x1]
      %v396 = vlaneseq
      %v397 = vshrl.u32 %v396, 7
      %v398 = vsub.s32 0, %v397
      %v399 = vrot.slane %v394, %v398
      %vm401 = vcmask 64512
      %v403 = vsel %vm401, %v389, 0
      %v406 = vsel %vm401, %v390, 0
      %v409 = vsel %vm401, %v391, 0
      %v412 = vsel %vm401, %v392, 0
      %414 = vmatprep.subr.mxu0 0.0
      %415 = vmatpush1.msra.mxu0 0.0
      %416 = vmatprep.subr.mxu0 0.0
      %417 = vmatpush1.msra.mxu0 0.0
      %418 = vmatprep.subr.mxu0 0.0
      %419 = vmatpush1.msra.mxu0 0.0
      %420 = vmatprep.subr.mxu0 0.0
      %421 = vmatpush1.msra.mxu0 0.0
      %422 = vmatprep.subr.mxu0 0.0
      %423 = vmatpush1.msra.mxu0 0.0
      %424 = vmatprep.subr.mxu0 0.0
      %425 = vmatpush1.msra.mxu0 0.0
      %426 = vmatprep.subr.mxu0 0.0
      %427 = vmatpush1.msra.mxu0 0.0
      %428 = vmatprep.subr.mxu0 0.0
      %429 = vmatpush1.msra.mxu0 0.0
      %430 = vmatprep.subr.mxu0 0.0
      %431 = vmatpush1.msra.mxu0 0.0
      %432 = vmatprep.subr.mxu0 0.0
      %433 = vmatpush1.msra.mxu0 0.0
      %434 = vmatprep.subr.mxu0 0.0
      %435 = vmatpush1.msra.mxu0 0.0
      %436 = vmatprep.subr.mxu0 0.0
      %437 = vmatpush1.msra.mxu0 0.0
      %438 = vmatprep.subr.mxu0 0.0
      %439 = vmatpush1.msra.mxu0 0.0
      %440 = vmatprep.subr.mxu0 0.0
      %441 = vmatpush1.msra.mxu0 0.0
      %442 = vmatprep.subr.mxu0 0.0
      %443 = vmatpush1.msra.mxu0 0.0
      %444 = vmatprep.subr.mxu0 0.0
      %445 = vmatpush1.msra.mxu0 %v393
      %446 = vmatprep.subr.mxu0 0.0
      %447 = vmatpush2.msra.mxu0 0.0
      %448 = vmatprep.subr.mxu0 0.0
      %449 = vmatpush2.msra.mxu0 0.0
      %450 = vmatprep.subr.mxu0 0.0
      %451 = vmatpush2.msra.mxu0 0.0
      %452 = vmatprep.subr.mxu0 0.0
      %453 = vmatpush2.msra.mxu0 0.0
      %454 = vmatprep.subr.mxu0 0.0
      %455 = vmatpush2.msra.mxu0 0.0
      %456 = vmatprep.subr.mxu0 0.0
      %457 = vmatpush2.msra.mxu0 0.0
      %458 = vmatprep.subr.mxu0 0.0
      %459 = vmatpush2.msra.mxu0 0.0
      %460 = vmatprep.subr.mxu0 0.0
      %461 = vmatpush2.msra.mxu0 0.0
      %462 = vmatprep.subr.mxu0 0.0
      %463 = vmatpush2.msra.mxu0 0.0
      %464 = vmatprep.subr.mxu0 0.0
      %465 = vmatpush2.msra.mxu0 0.0
      %466 = vmatprep.subr.mxu0 0.0
      %467 = vmatpush2.msra.mxu0 0.0
      %468 = vmatprep.subr.mxu0 0.0
      %469 = vmatpush2.msra.mxu0 0.0
      %470 = vmatprep.subr.mxu0 0.0
      %471 = vmatpush2.msra.mxu0 0.0
      %472 = vmatprep.subr.mxu0 0.0
      %473 = vmatpush2.msra.mxu0 0.0
      %474 = vmatprep.subr.mxu0 0.0
      %475 = vmatpush2.msra.mxu0 0.0
      %476 = vmatprep.subr.mxu0 0.0
      %477 = vmatpush2.msra.mxu0 0.0
      %478 = vmatprep.mubr.f32.mxu0 0.0
      %479 = vmatmul.mubr.f32.gmra.mxu0 %v403
      %v480 = vpop.f32.mrf.mxu0
      %v481 = vadd.f32 %v399, %v480
      %v482 = vpop.f32.mrf.mxu0
      %483 = vmatprep.mubr.f32.mxu0 0.0
      %484 = vmatmul.mubr.f32.gmra.mxu0 %v406
      %v485 = vpop.f32.mrf.mxu0
      %v486 = vadd.f32 %v399, %v485
      %v487 = vpop.f32.mrf.mxu0
      %488 = vmatprep.mubr.f32.mxu0 0.0
      %489 = vmatmul.mubr.f32.gmra.mxu0 %v409
      %v490 = vpop.f32.mrf.mxu0
      %v491 = vadd.f32 %v399, %v490
      %v492 = vpop.f32.mrf.mxu0
      %493 = vmatprep.mubr.f32.mxu0 0.0
      %494 = vmatmul.mubr.f32.gmra.mxu0 %v412
      %v495 = vpop.f32.mrf.mxu0
      %v496 = vadd.f32 %v399, %v495
      %v497 = vpop.f32.mrf.mxu0
      %498 = vdwg.mxu0
      %v499 = vmax.f32 %v481, 0.0
      %v500 = vmax.f32 %v486, 0.0
      %v501 = vmax.f32 %v491, 0.0
      %v502 = vmax.f32 %v496, 0.0
      %v503 = vld [vmem:[%s5] sm:$0xff]
      %v504 = vld [vmem:[%s5 + $0x8] sm:$0xff]
      %v505 = vld [vmem:[%s5 + $0x10] sm:$0xff]
      %v506 = vld [vmem:[%s5 + $0x18] sm:$0xff]
      %v507 = vld [vmem:[%s5 + $0x20] sm:$0xff]
      %v508 = vld [vmem:[%s5 + $0x28] sm:$0xff]
      %v509 = vld [vmem:[%s5 + $0x30] sm:$0xff]
      %v510 = vld [vmem:[%s5 + $0x38] sm:$0xff]
      %v511 = vld [vmem:[%s6] sm:$0x1]
      %v513 = vlaneseq
      %v514 = vshrl.u32 %v513, 7
      %v515 = vsub.s32 0, %v514
      %v516 = vrot.slane %v511, %v515
      %vm518 = vcmask 523264
      %v520 = vsel %vm518, %v499, 0
      %v523 = vsel %vm518, %v500, 0
      %v526 = vsel %vm518, %v501, 0
      %v529 = vsel %vm518, %v502, 0
      %531 = vmatprep.subr.mxu0 0.0
      %532 = vmatpush1.msra.mxu0 0.0
      %533 = vmatprep.subr.mxu0 0.0
      %534 = vmatpush1.msra.mxu0 0.0
      %535 = vmatprep.subr.mxu0 0.0
      %536 = vmatpush1.msra.mxu0 0.0
      %537 = vmatprep.subr.mxu0 0.0
      %538 = vmatpush1.msra.mxu0 0.0
      %539 = vmatprep.subr.mxu0 0.0
      %540 = vmatpush1.msra.mxu0 0.0
      %541 = vmatprep.subr.mxu0 0.0
      %542 = vmatpush1.msra.mxu0 0.0
      %543 = vmatprep.subr.mxu0 0.0
      %544 = vmatpush1.msra.mxu0 0.0
      %545 = vmatprep.subr.mxu0 0.0
      %546 = vmatpush1.msra.mxu0 0.0
      %547 = vmatprep.subr.mxu0 0.0
      %548 = vmatpush1.msra.mxu0 %v510
      %549 = vmatprep.subr.mxu0 0.0
      %550 = vmatpush1.msra.mxu0 %v509
      %551 = vmatprep.subr.mxu0 0.0
      %552 = vmatpush1.msra.mxu0 %v508
      %553 = vmatprep.subr.mxu0 0.0
      %554 = vmatpush1.msra.mxu0 %v507
      %555 = vmatprep.subr.mxu0 0.0
      %556 = vmatpush1.msra.mxu0 %v506
      %557 = vmatprep.subr.mxu0 0.0
      %558 = vmatpush1.msra.mxu0 %v505
      %559 = vmatprep.subr.mxu0 0.0
      %560 = vmatpush1.msra.mxu0 %v504
      %561 = vmatprep.subr.mxu0 0.0
      %562 = vmatpush1.msra.mxu0 %v503
      %563 = vmatprep.subr.mxu0 0.0
      %564 = vmatpush2.msra.mxu0 0.0
      %565 = vmatprep.subr.mxu0 0.0
      %566 = vmatpush2.msra.mxu0 0.0
      %567 = vmatprep.subr.mxu0 0.0
      %568 = vmatpush2.msra.mxu0 0.0
      %569 = vmatprep.subr.mxu0 0.0
      %570 = vmatpush2.msra.mxu0 0.0
      %571 = vmatprep.subr.mxu0 0.0
      %572 = vmatpush2.msra.mxu0 0.0
      %573 = vmatprep.subr.mxu0 0.0
      %574 = vmatpush2.msra.mxu0 0.0
      %575 = vmatprep.subr.mxu0 0.0
      %576 = vmatpush2.msra.mxu0 0.0
      %577 = vmatprep.subr.mxu0 0.0
      %578 = vmatpush2.msra.mxu0 0.0
      %579 = vmatprep.subr.mxu0 0.0
      %580 = vmatpush2.msra.mxu0 0.0
      %581 = vmatprep.subr.mxu0 0.0
      %582 = vmatpush2.msra.mxu0 0.0
      %583 = vmatprep.subr.mxu0 0.0
      %584 = vmatpush2.msra.mxu0 0.0
      %585 = vmatprep.subr.mxu0 0.0
      %586 = vmatpush2.msra.mxu0 0.0
      %587 = vmatprep.subr.mxu0 0.0
      %588 = vmatpush2.msra.mxu0 0.0
      %589 = vmatprep.subr.mxu0 0.0
      %590 = vmatpush2.msra.mxu0 0.0
      %591 = vmatprep.subr.mxu0 0.0
      %592 = vmatpush2.msra.mxu0 0.0
      %593 = vmatprep.subr.mxu0 0.0
      %594 = vmatpush2.msra.mxu0 0.0
      %595 = vmatprep.mubr.f32.mxu0 0.0
      %596 = vmatmul.mubr.f32.gmra.mxu0 %v520
      %v597 = vpop.f32.mrf.mxu0
      %v598 = vadd.f32 %v516, %v597
      %v599 = vpop.f32.mrf.mxu0
      %600 = vmatprep.mubr.f32.mxu0 0.0
      %601 = vmatmul.mubr.f32.gmra.mxu0 %v523
      %v602 = vpop.f32.mrf.mxu0
      %v603 = vadd.f32 %v516, %v602
      %v604 = vpop.f32.mrf.mxu0
      %605 = vmatprep.mubr.f32.mxu0 0.0
      %606 = vmatmul.mubr.f32.gmra.mxu0 %v526
      %v607 = vpop.f32.mrf.mxu0
      %v608 = vadd.f32 %v516, %v607
      %v609 = vpop.f32.mrf.mxu0
      %610 = vmatprep.mubr.f32.mxu0 0.0
      %611 = vmatmul.mubr.f32.gmra.mxu0 %v529
      %v612 = vpop.f32.mrf.mxu0
      %v613 = vadd.f32 %v516, %v612
      %v614 = vpop.f32.mrf.mxu0
      %615 = vdwg.mxu0
      %v616 = vmax.f32 %v598, 0.0
      %v617 = vmax.f32 %v603, 0.0
      %v618 = vmax.f32 %v608, 0.0
      %v619 = vmax.f32 %v613, 0.0
      %v620 = vld [vmem:[%s7] sm:$0xff]
      %v621 = vld [vmem:[%s7 + $0x8] sm:$0xff]
      %v622 = vld [vmem:[%s7 + $0x10] sm:$0xff]
      %v623 = vld [vmem:[%s7 + $0x18] sm:$0xff]
      %v624 = vld [vmem:[%s7 + $0x20] sm:$0xff]
      %v625 = vld [vmem:[%s7 + $0x28] sm:$0xff]
      %v626 = vld [vmem:[%s7 + $0x30] sm:$0xff]
      %v627 = vld [vmem:[%s7 + $0x38] sm:$0xff]
      %v628 = vld [vmem:[%s8] sm:$0x1]
      %v630 = vlaneseq
      %v631 = vshrl.u32 %v630, 7
      %v632 = vsub.s32 0, %v631
      %v633 = vrot.slane %v628, %v632
      %v636 = vsel %vm518, %v616, 0
      %v639 = vsel %vm518, %v617, 0
      %v642 = vsel %vm518, %v618, 0
      %v645 = vsel %vm518, %v619, 0
      %647 = vmatprep.subr.mxu0 0.0
      %648 = vmatpush1.msra.mxu0 0.0
      %649 = vmatprep.subr.mxu0 0.0
      %650 = vmatpush1.msra.mxu0 0.0
      %651 = vmatprep.subr.mxu0 0.0
      %652 = vmatpush1.msra.mxu0 0.0
      %653 = vmatprep.subr.mxu0 0.0
      %654 = vmatpush1.msra.mxu0 0.0
      %655 = vmatprep.subr.mxu0 0.0
      %656 = vmatpush1.msra.mxu0 0.0
      %657 = vmatprep.subr.mxu0 0.0
      %658 = vmatpush1.msra.mxu0 0.0
      %659 = vmatprep.subr.mxu0 0.0
      %660 = vmatpush1.msra.mxu0 0.0
      %661 = vmatprep.subr.mxu0 0.0
      %662 = vmatpush1.msra.mxu0 0.0
      %663 = vmatprep.subr.mxu0 0.0
      %664 = vmatpush1.msra.mxu0 %v627
      %665 = vmatprep.subr.mxu0 0.0
      %666 = vmatpush1.msra.mxu0 %v626
      %667 = vmatprep.subr.mxu0 0.0
      %668 = vmatpush1.msra.mxu0 %v625
      %669 = vmatprep.subr.mxu0 0.0
      %670 = vmatpush1.msra.mxu0 %v624
      %671 = vmatprep.subr.mxu0 0.0
      %672 = vmatpush1.msra.mxu0 %v623
      %673 = vmatprep.subr.mxu0 0.0
      %674 = vmatpush1.msra.mxu0 %v622
      %675 = vmatprep.subr.mxu0 0.0
      %676 = vmatpush1.msra.mxu0 %v621
      %677 = vmatprep.subr.mxu0 0.0
      %678 = vmatpush1.msra.mxu0 %v620
      %679 = vmatprep.subr.mxu0 0.0
      %680 = vmatpush2.msra.mxu0 0.0
      %681 = vmatprep.subr.mxu0 0.0
      %682 = vmatpush2.msra.mxu0 0.0
      %683 = vmatprep.subr.mxu0 0.0
      %684 = vmatpush2.msra.mxu0 0.0
      %685 = vmatprep.subr.mxu0 0.0
      %686 = vmatpush2.msra.mxu0 0.0
      %687 = vmatprep.subr.mxu0 0.0
      %688 = vmatpush2.msra.mxu0 0.0
      %689 = vmatprep.subr.mxu0 0.0
      %690 = vmatpush2.msra.mxu0 0.0
      %691 = vmatprep.subr.mxu0 0.0
      %692 = vmatpush2.msra.mxu0 0.0
      %693 = vmatprep.subr.mxu0 0.0
      %694 = vmatpush2.msra.mxu0 0.0
      %695 = vmatprep.subr.mxu0 0.0
      %696 = vmatpush2.msra.mxu0 0.0
      %697 = vmatprep.subr.mxu0 0.0
      %698 = vmatpush2.msra.mxu0 0.0
      %699 = vmatprep.subr.mxu0 0.0
      %700 = vmatpush2.msra.mxu0 0.0
      %701 = vmatprep.subr.mxu0 0.0
      %702 = vmatpush2.msra.mxu0 0.0
      %703 = vmatprep.subr.mxu0 0.0
      %704 = vmatpush2.msra.mxu0 0.0
      %705 = vmatprep.subr.mxu0 0.0
      %706 = vmatpush2.msra.mxu0 0.0
      %707 = vmatprep.subr.mxu0 0.0
      %708 = vmatpush2.msra.mxu0 0.0
      %709 = vmatprep.subr.mxu0 0.0
      %710 = vmatpush2.msra.mxu0 0.0
      %711 = vmatprep.mubr.f32.mxu0 0.0
      %712 = vmatmul.mubr.f32.gmra.mxu0 %v636
      %v713 = vpop.f32.mrf.mxu0
      %v714 = vadd.f32 %v633, %v713
      %v715 = vpop.f32.mrf.mxu0
      %716 = vmatprep.mubr.f32.mxu0 0.0
      %717 = vmatmul.mubr.f32.gmra.mxu0 %v639
      %v718 = vpop.f32.mrf.mxu0
      %v719 = vadd.f32 %v633, %v718
      %v720 = vpop.f32.mrf.mxu0
      %721 = vmatprep.mubr.f32.mxu0 0.0
      %722 = vmatmul.mubr.f32.gmra.mxu0 %v642
      %v723 = vpop.f32.mrf.mxu0
      %v724 = vadd.f32 %v633, %v723
      %v725 = vpop.f32.mrf.mxu0
      %726 = vmatprep.mubr.f32.mxu0 0.0
      %727 = vmatmul.mubr.f32.gmra.mxu0 %v645
      %v728 = vpop.f32.mrf.mxu0
      %v729 = vadd.f32 %v633, %v728
      %v730 = vpop.f32.mrf.mxu0
      %731 = vdwg.mxu0
      %v732 = vtanh.pop %v714
      %v733 = vtanh.pop %v719
      %v734 = vtanh.pop %v724
      %v735 = vtanh.pop %v729
      %v736 = vmul.f32 %v732, 1.442695
      %v737 = vpow.pop %v736
      %v738 = vmul.f32 %v733, 1.442695
      %v739 = vpow.pop %v738
      %v740 = vmul.f32 %v734, 1.442695
      %v741 = vpow.pop %v740
      %v742 = vmul.f32 %v735, 1.442695
      %v743 = vpow.pop %v742
      %v744 = vmul.f32 %v377, %v737
      %v745 = vmul.f32 %v378, %v739
      %v746 = vmul.f32 %v379, %v741
      %v747 = vmul.f32 %v380, %v743
      %752 = vrot.lane.b32.xlu0 %v714, 120
      %v753 = vpop.permute.xlu0 %752
      %754 = vrot.lane.b32.xlu0 %v719, 120
      %v755 = vpop.permute.xlu0 %754
      %756 = vrot.lane.b32.xlu0 %v724, 120
      %v757 = vpop.permute.xlu0 %756
      %758 = vrot.lane.b32.xlu0 %v729, 120
      %v759 = vpop.permute.xlu0 %758
      %v764 = vadd.f32 %v744, %v753
      %v765 = vadd.f32 %v745, %v755
      %v766 = vadd.f32 %v746, %v757
      %v767 = vadd.f32 %v747, %v759
      %v769 = vlaneseq
      %v770 = vshrl.u32 %v769, 7
      %v771 = vsub.s32 0, %v770
      %v772 = vrot.slane %v382, %v771
      %v774 = vmul.f32 %v772, %v764
      %v775 = vmul.f32 %v772, %v765
      %v776 = vmul.f32 %v772, %v766
      %v777 = vmul.f32 %v772, %v767
      %v778 = vadd.f32 %v389, %v774
      %v779 = vadd.f32 %v390, %v775
      %v780 = vadd.f32 %v391, %v776
      %v781 = vadd.f32 %v392, %v777
      %782 = vst.msk [vmem:[%s369] sm:$0xff] %vm401, %v778
      %783 = vst.msk [vmem:[%s369 + $0x8] sm:$0xff] %vm401, %v779
      %784 = vst.msk [vmem:[%s369 + $0x10] sm:$0xff] %vm401, %v780
      %785 = vst.msk [vmem:[%s369 + $0x18] sm:$0xff] %vm401, %v781
      %786 = vst.msk [vmem:[%s375] sm:$0xff] %vm401, %v732
      %787 = vst.msk [vmem:[%s375 + $0x8] sm:$0xff] %vm401, %v733
      %788 = vst.msk [vmem:[%s375 + $0x10] sm:$0xff] %vm401, %v734
      %789 = vst.msk [vmem:[%s375 + $0x18] sm:$0xff] %vm401, %v735
      %s790 = smul.u32 4, %s22
      %p791 = scmp.lt.s32.totalorder %s790, 7
      %s792 = scalar_select %p791, %s790, 7
      %s793 = smul.addr %s792, 8
      %s794 = scalar_lea.vmem %s9, %s793
      %s795 = smul.u32 4, %s22
      %p796 = scmp.lt.s32.totalorder %s795, 7
      %s797 = scalar_select %p796, %s795, 7
      %s798 = smul.addr %s797, 8
      %s799 = scalar_lea.vmem %s10, %s798
      // Predicated region
      $region57: #{tpu_custom_call.1} parent=55 // pred_check
        %p800 = pneg %p234
      $region58: #{tpu_custom_call.1} parent=55 // pred_check_branch
        %802 = sbr.rel (%p800) target = $region60
      $region59: #{tpu_custom_call.1} parent=55 // pred_region
        %s803 = smul.u32 4, %s22
      $region60: #{tpu_custom_call.1} parent=55 // pred_fallthru
        _
      // Predicated region
      $region61: #{tpu_custom_call.1} parent=55 // pred_check
        %p804 = pneg %p260
      $region62: #{tpu_custom_call.1} parent=55 // pred_check_branch
        %806 = sbr.rel (%p804) target = $region64
      $region63: #{tpu_custom_call.1} parent=55 // pred_region
        %s807 = smul.u32 4, %s22
      $region64: #{tpu_custom_call.1} parent=55 // pred_fallthru
        _
    $region56: #{tpu_custom_call.1} parent=5 // pred_fallthru
      _
    %p808 = scmp.le.s32.totalorder 2, %s17
    // Predicated region
    $region65: #{tpu_custom_call.1} parent=5 // pred_check
      %p809 = pneg %p808
    $region66: #{tpu_custom_call.1} parent=5 // pred_check_branch
      %811 = sbr.rel (%p809) target = $region68
    $region67: #{tpu_custom_call.1} parent=5 // pred_region
      %s812 = ssub.s32 %s17, 2
      // Predicated region
      $region69: #{tpu_custom_call.1} parent=67 // pred_check
        %p813 = pneg %p240
      $region70: #{tpu_custom_call.1} parent=67 // pred_check_branch
        %815 = sbr.rel (%p813) target = $region72
      $region71: #{tpu_custom_call.1} parent=67 // pred_region
        %s816 = smul.u32 4, %s23
        %p817 = scmp.lt.s32.totalorder %s816, 7
        %s818 = scalar_select %p817, %s816, 7
        %s819 = smul.addr %s818, 8
        %s820 = scalar_lea.vmem %s9, %s819
      $region72: #{tpu_custom_call.1} parent=67 // pred_fallthru
        _
      // Predicated region
      $region73: #{tpu_custom_call.1} parent=67 // pred_check
        %p821 = pneg %p266
      $region74: #{tpu_custom_call.1} parent=67 // pred_check_branch
        %823 = sbr.rel (%p821) target = $region76
      $region75: #{tpu_custom_call.1} parent=67 // pred_region
        %s824 = smul.u32 4, %s23
        %p825 = scmp.lt.s32.totalorder %s824, 7
        %s826 = scalar_select %p825, %s824, 7
        %s827 = smul.addr %s826, 8
        %s828 = scalar_lea.vmem %s10, %s827
      $region76: #{tpu_custom_call.1} parent=67 // pred_fallthru
        _
    $region68: #{tpu_custom_call.1} parent=5 // pred_fallthru
      _
  $region6: #{tpu_custom_call.1} parent=0 // loop_footer
    %s21 = sadd.s32 1, %s17
  $region7: #{tpu_custom_call.1} parent=0 // loop_footer_branch
    %16 = sbr.rel target = $region3
  $region8: #{tpu_custom_call.1} parent=0 // loop_exit
    _

</llo_original>
